<compile_context>
chip_gen: v6e
topology: v6e:2x2x1
jax: 0.10.0
libtpu: 0.0.40
codegen_flags: <defaults>
</compile_context>

<pallas_src>
import jax
import jax.numpy as jnp
from jax.experimental import pallas as pl
from jax.experimental.pallas import tpu as pltpu


# ---------------------------------------------------------------------------
# Pallas kernels
# ---------------------------------------------------------------------------
def _mlp_tail(h1_pre, b1_ref, w2_ref, b2_ref, wl_ref, bl_ref, o_ref):
    # layer-1 bias + ReLU in f32.
    h1 = jnp.maximum(h1_pre + b1_ref[...], 0.0)
    # layer 2: canonical (TB,H) @ (H,H) bf16 matmul, f32 accumulate.
    h2 = jnp.dot(h1.astype(w2_ref.dtype), w2_ref[...],
                 preferred_element_type=jnp.float32)
    h2 = jnp.maximum(h2 + b2_ref[...], 0.0)
    # 1-wide head on the VPU/XLU: r[i] = sum_h h2[i,h] * wl[0,h].  Deliberately NOT a
    # dot_general with a transposed RHS (could lower to a full (TB,H) XLU transpose) and
    # NOT an N=1 MXU pass (keeps the MXU free for the big matmuls).
    r = jnp.sum(h2 * wl_ref[...], axis=-1, keepdims=True)
    # scalar head bias from SMEM + tanh (EUP), stored as a (TB, 1) column.
    o_ref[...] = jnp.tanh(r + bl_ref[0, 0])


def _reward_kernel_obs_act(obs_ref, act_ref, w1o_ref, w1a_ref, b1_ref,
                           w2_ref, b2_ref, wl_ref, bl_ref, o_ref):
    # layer 1 with the torch.cat fused as a split matmul: x @ W1 == obs @ W1o + act @ W1a
    h1_pre = jnp.dot(obs_ref[...], w1o_ref[...], preferred_element_type=jnp.float32)
    h1_pre = h1_pre + jnp.dot(act_ref[...], w1a_ref[...],
                              preferred_element_type=jnp.float32)
    _mlp_tail(h1_pre, b1_ref, w2_ref, b2_ref, wl_ref, bl_ref, o_ref)


def _reward_kernel_obs_only(obs_ref, w1_ref, b1_ref, w2_ref, b2_ref,
                            wl_ref, bl_ref, o_ref):
    h1_pre = jnp.dot(obs_ref[...], w1_ref[...], preferred_element_type=jnp.float32)
    _mlp_tail(h1_pre, b1_ref, w2_ref, b2_ref, wl_ref, bl_ref, o_ref)


# ---------------------------------------------------------------------------
# Tiling / VMEM planning
# ---------------------------------------------------------------------------
def _vmem_capacity_bytes():
    try:
        return int(getattr(pltpu.get_tpu_info(), "vmem_capacity_bytes", 64 << 20))
    except Exception:
        return 64 << 20          # v7x per-TensorCore VMEM; safe lower bound everywhere


def _plan_tiles(batch, in_dim, hidden):
    """VMEM- and generation-aware batch tiling.

    Returns (tb, padded_batch, grid, vmem_limit_bytes).
    """
    vmem_cap = _vmem_capacity_bytes()
    budget = int(vmem_cap * 0.6)          # headroom for Mosaic-internal temporaries

    # resident, single-buffered weights: bf16 matmul weights + f32 biases / head row.
    weight_bytes = (in_dim * hidden + hidden * hidden) * 2 + (3 * hidden + 1) * 4

    def working_set(tb):
        acts = 2 * tb * in_dim * 2        # double-buffered bf16 activation tiles
        outs = 2 * tb * 4                 # double-buffered f32 output column
        temps = 4 * tb * hidden * 4       # h1_pre / h1 bf16 copy / h2 / slack
        return weight_bytes + acts + outs + temps

    if batch <= 128:
        tb = -(-batch // 8) * 8           # pad to a sublane multiple; single block
    else:
        tb = 128
        for cand in (1024, 512, 256):     # biggest batch tile that fits the VMEM budget
            if working_set(cand) <= budget:
                tb = cand
                break
        # v7x megacore: guarantee >= 2 grid steps so the second TensorCore is not idle
        # (the batch axis is marked "parallel"); harmless on single-core v5e/v6e.
        while tb > 128 and -(-batch // tb) < 2:
            tb //= 2

    padded = -(-batch // tb) * tb
    grid = padded // tb
    vmem_limit = min(int(vmem_cap * 0.9),
                     max(32 << 20, int(1.5 * working_set(tb))))
    return tb, padded, grid, vmem_limit


# ---------------------------------------------------------------------------
# pallas_call wrapper
# ---------------------------------------------------------------------------
def _call_kernel(kernel, feats, weights, bl, hidden, tb, grid, padded_batch, vmem_limit):
    in_dim = sum(int(f.shape[1]) for f in feats)

    # activations: tiled over the (padded) batch.
    in_specs = [pl.BlockSpec((tb, int(f.shape[1])), lambda i: (i, 0)) for f in feats]
    # weights/biases: full-array blocks with constant index_maps -> resident in VMEM
    # across grid steps, single-buffered (they never change, so no second buffer).
    in_specs += [pl.BlockSpec(w.shape, lambda i: (0, 0), pipeline_mode=pl.Buffered(1))
                 for w in weights]
    # scalar head bias lives in SMEM (no padded (8,128) VMEM tile / extra DMA).
    in_specs.append(pl.BlockSpec(memory_space=pltpu.MemorySpace.SMEM))

    flops = 2 * padded_batch * (in_dim * hidden + hidden * hidden + hidden)
    bytes_accessed = (sum(int(a.size) * a.dtype.itemsize for a in feats)
                      + sum(int(w.size) * w.dtype.itemsize for w in weights)
                      + int(bl.size) * bl.dtype.itemsize + padded_batch * 4)

    return pl.pallas_call(
        kernel,
        out_shape=jax.ShapeDtypeStruct((padded_batch, 1), jnp.float32),
        grid=(grid,),
        in_specs=in_specs,
        out_specs=pl.BlockSpec((tb, 1), lambda i: (i, 0)),
        compiler_params=pltpu.CompilerParams(
            dimension_semantics=("parallel",),
            vmem_limit_bytes=vmem_limit),
        cost_estimate=pl.CostEstimate(
            flops=flops, transcendentals=padded_batch,
            bytes_accessed=bytes_accessed),
    )(*feats, *weights, bl)


def _jax_reference(obs, actions, params):
    """Pure-JAX f32 forward matching the original PyTorch module (used for tiny shapes
    and for validation)."""
    w1o, w1a, b1, w2, b2, wl, bl = params
    obs = jnp.asarray(obs, jnp.float32)
    if actions is not None:
        actions = jnp.asarray(actions, jnp.float32)
        actions = actions.reshape(actions.shape[0], -1)
        x = jnp.concatenate([obs, actions], axis=1)
        w1 = jnp.concatenate([w1o, w1a], axis=0)
    else:
        x, w1 = obs, w1o
    h1 = jnp.maximum(x @ w1 + b1, 0.0)
    h2 = jnp.maximum(h1 @ w2 + b2, 0.0)
    return jnp.tanh(h2 @ wl.T + bl)


def reward_model_forward(obs, actions, params, force_pallas=None):
    """Pallas-fused equivalent of RewardModel.forward (cast/flatten glue stays in JAX)."""
    w1o, w1a, b1, w2, b2, wl, bl = params
    hidden = int(w2.shape[0])

    obs = jnp.asarray(obs, jnp.float32)
    if actions is not None:
        actions = jnp.asarray(actions, jnp.float32)
        actions = actions.reshape(actions.shape[0], -1)

    batch = int(obs.shape[0])
    in_dim = int(obs.shape[1]) + (int(actions.shape[1]) if actions is not None else 0)

    use_pallas = force_pallas
    if use_pallas is None:
        # Tiny problems are dominated by custom-call + per-grid-step overhead; let XLA
        # fuse the three small dots instead.
        use_pallas = batch * hidden >= (1 << 15)
    if not use_pallas:
        return _jax_reference(obs, actions, params)

    tb, padded, grid, vmem_limit = _plan_tiles(batch, in_dim, hidden)
    pad = padded - batch

    # bf16 inputs for the MXU (f32 accumulation inside the kernel). For repeated calls,
    # pre-cast the weights once outside instead of per call.
    obs_b = obs.astype(jnp.bfloat16)
    if pad:
        obs_b = jnp.pad(obs_b, ((0, pad), (0, 0)))

    if actions is not None:
        act_b = actions.astype(jnp.bfloat16)
        if pad:
            act_b = jnp.pad(act_b, ((0, pad), (0, 0)))
        feats = (obs_b, act_b)
        weights = (w1o.astype(jnp.bfloat16), w1a.astype(jnp.bfloat16),
                   b1.astype(jnp.float32), w2.astype(jnp.bfloat16),
                   b2.astype(jnp.float32), wl.astype(jnp.float32))
        kernel = _reward_kernel_obs_act
    else:
        feats = (obs_b,)
        weights = (w1o.astype(jnp.bfloat16), b1.astype(jnp.float32),
                   w2.astype(jnp.bfloat16), b2.astype(jnp.float32),
                   wl.astype(jnp.float32))
        kernel = _reward_kernel_obs_only

    out = _call_kernel(kernel, feats, weights,
                       jnp.asarray(bl, jnp.float32).reshape(1, 1),
                       hidden, tb, grid, padded, vmem_limit)
    return out[:batch]        # drop zero-padded rows -> (batch, 1)


# ---------------------------------------------------------------------------
# Deterministic parameter init (synthetic backbone: MLP in->H->H, ReLU; head H->1).
# TODO(synk): the original module wraps an arbitrary `backbone: nn.Module`; a 2-layer
# Linear+ReLU MLP with output_dim=hidden stands in for it here.
# ---------------------------------------------------------------------------
def init_params(key, obs_dim, act_dim, hidden):
    in_dim = obs_dim + act_dim
    k = jax.random.split(key, 6)
    s1 = 1.0 / jnp.sqrt(in_dim)
    s2 = 1.0 / jnp.sqrt(hidden)
    w1 = jax.random.uniform(k[0], (in_dim, hidden), jnp.float32, -s1, s1)
    b1 = jax.random.uniform(k[1], (1, hidden), jnp.float32, -s1, s1)
    w2 = jax.random.uniform(k[2], (hidden, hidden), jnp.float32, -s2, s2)
    b2 = jax.random.uniform(k[3], (1, hidden), jnp.float32, -s2, s2)
    wl = jax.random.uniform(k[4], (1, hidden), jnp.float32, -s2, s2)
    bl = jax.random.uniform(k[5], (1, 1), jnp.float32, -s2, s2)
    # kernel layout: W1 row-split into (obs rows, action rows); head weight as a (1,H) row.
    return (w1[:obs_dim], w1[obs_dim:], b1, w2, b2, wl, bl)


if __name__ == "__main__":
    key = jax.random.PRNGKey(0)
    kp, ko, ka, ko2 = jax.random.split(key, 4)

    BATCH, OBS_DIM, ACT_DIM, HIDDEN = 8, 24, 8, 32
    params = init_params(kp, OBS_DIM, ACT_DIM, HIDDEN)
    obs = jax.random.normal(ko, (BATCH, OBS_DIM), jnp.float32)
    actions = jax.random.normal(ka, (BATCH, ACT_DIM), jnp.float32)

    # obs + actions path (force the Pallas kernel even at these tiny demo shapes).
    rewards = reward_model_forward(obs, actions, params, force_pallas=True)
    rewards = jax.block_until_ready(rewards)
    ref = _jax_reference(obs, actions, params)
    assert rewards.shape == (BATCH, 1)
    # bf16 MXU inputs with f32 accumulation: compare to the f32 reference with a
    # correspondingly relaxed tolerance.
    assert jnp.allclose(rewards, ref, atol=2e-2), float(jnp.max(jnp.abs(rewards - ref)))

    # actions=None path with a non-multiple-of-8 batch (exercises padding + slicing).
    obs5 = jax.random.normal(ko2, (5, OBS_DIM), jnp.float32)
    r5 = jax.block_until_ready(reward_model_forward(obs5, None, params, force_pallas=True))
    ref5 = _jax_reference(obs5, None, params)
    assert r5.shape == (5, 1)
    assert jnp.allclose(r5, ref5, atol=2e-2), float(jnp.max(jnp.abs(r5 - ref5)))

    print("KERNEL_OK")
</pallas_src>

<mosaic_0001>
module attributes {stable_mosaic.version = 11 : i64} {
  func.func @_reward_kernel_obs_act(%arg0: i32, %arg1: memref<8x24xbf16, #tpu.memory_space<vmem>>, %arg2: memref<8x8xbf16, #tpu.memory_space<vmem>>, %arg3: memref<24x32xbf16, #tpu.memory_space<vmem>>, %arg4: memref<8x32xbf16, #tpu.memory_space<vmem>>, %arg5: memref<1x32xf32, #tpu.memory_space<vmem>>, %arg6: memref<32x32xbf16, #tpu.memory_space<vmem>>, %arg7: memref<1x32xf32, #tpu.memory_space<vmem>>, %arg8: memref<1x32xf32, #tpu.memory_space<vmem>>, %arg9: memref<1x1xf32, #tpu.memory_space<smem>>, %arg10: memref<8x1xf32, #tpu.memory_space<vmem>>) attributes {dimension_semantics = [#tpu.dimension_semantics<parallel>], iteration_bounds = array<i64: 1>, scalar_prefetch = 0 : i64, scratch_operands = 0 : i64, tpu.core_type = #tpu.core_type<tc>, window_params = [{transform_indices = @transform_0, window_bounds = array<i64: 8, 24>}, {transform_indices = @transform_1, window_bounds = array<i64: 8, 8>}, {pipeline_mode = #tpu.pipeline_mode<synchronous>, transform_indices = @transform_2, window_bounds = array<i64: 24, 32>}, {pipeline_mode = #tpu.pipeline_mode<synchronous>, transform_indices = @transform_3, window_bounds = array<i64: 8, 32>}, {pipeline_mode = #tpu.pipeline_mode<synchronous>, transform_indices = @transform_4, window_bounds = array<i64: 1, 32>}, {pipeline_mode = #tpu.pipeline_mode<synchronous>, transform_indices = @transform_5, window_bounds = array<i64: 32, 32>}, {pipeline_mode = #tpu.pipeline_mode<synchronous>, transform_indices = @transform_6, window_bounds = array<i64: 1, 32>}, {pipeline_mode = #tpu.pipeline_mode<synchronous>, transform_indices = @transform_7, window_bounds = array<i64: 1, 32>}, {transform_indices = @transform_8, window_bounds = array<i64: 1, 1>}, {transform_indices = @transform_9, window_bounds = array<i64: 8, 1>}]} {
    %c0 = arith.constant 0 : index
    %c0_0 = arith.constant 0 : index
    %0 = vector.load %arg1[%c0, %c0_0] : memref<8x24xbf16, #tpu.memory_space<vmem>>, vector<8x24xbf16>
    %c0_1 = arith.constant 0 : index
    %c0_2 = arith.constant 0 : index
    %1 = vector.load %arg3[%c0_1, %c0_2] : memref<24x32xbf16, #tpu.memory_space<vmem>>, vector<24x32xbf16>
    %cst = arith.constant dense<0.000000e+00> : vector<8x32xf32>
    %2 = tpu.matmul %0, %1, %cst {dimension_numbers = #tpu.dot_dimension_numbers<[1], [0], [0], [1], [0, 0, 1, 1], [], []>} : vector<8x24xbf16>, vector<24x32xbf16>, vector<8x32xf32> -> vector<8x32xf32>
    %c0_3 = arith.constant 0 : index
    %c0_4 = arith.constant 0 : index
    %3 = vector.load %arg2[%c0_3, %c0_4] : memref<8x8xbf16, #tpu.memory_space<vmem>>, vector<8x8xbf16>
    %c0_5 = arith.constant 0 : index
    %c0_6 = arith.constant 0 : index
    %4 = vector.load %arg4[%c0_5, %c0_6] : memref<8x32xbf16, #tpu.memory_space<vmem>>, vector<8x32xbf16>
    %cst_7 = arith.constant dense<0.000000e+00> : vector<8x32xf32>
    %5 = tpu.matmul %3, %4, %cst_7 {dimension_numbers = #tpu.dot_dimension_numbers<[1], [0], [0], [1], [0, 0, 1, 1], [], []>} : vector<8x8xbf16>, vector<8x32xbf16>, vector<8x32xf32> -> vector<8x32xf32>
    %6 = arith.addf %2, %5 : vector<8x32xf32>
    %c0_8 = arith.constant 0 : index
    %c0_9 = arith.constant 0 : index
    %7 = vector.load %arg5[%c0_8, %c0_9] : memref<1x32xf32, #tpu.memory_space<vmem>>, vector<1x32xf32>
    %8 = vector.broadcast %7 : vector<1x32xf32> to vector<8x32xf32>
    %9 = arith.addf %6, %8 : vector<8x32xf32>
    %cst_10 = arith.constant 0.000000e+00 : f32
    %10 = vector.broadcast %cst_10 : f32 to vector<8x32xf32>
    %11 = arith.maximumf %9, %10 : vector<8x32xf32>
    %12 = arith.truncf %11 : vector<8x32xf32> to vector<8x32xbf16>
    %c0_11 = arith.constant 0 : index
    %c0_12 = arith.constant 0 : index
    %13 = vector.load %arg6[%c0_11, %c0_12] : memref<32x32xbf16, #tpu.memory_space<vmem>>, vector<32x32xbf16>
    %cst_13 = arith.constant dense<0.000000e+00> : vector<8x32xf32>
    %14 = tpu.matmul %12, %13, %cst_13 {dimension_numbers = #tpu.dot_dimension_numbers<[1], [0], [0], [1], [0, 0, 1, 1], [], []>} : vector<8x32xbf16>, vector<32x32xbf16>, vector<8x32xf32> -> vector<8x32xf32>
    %c0_14 = arith.constant 0 : index
    %c0_15 = arith.constant 0 : index
    %15 = vector.load %arg7[%c0_14, %c0_15] : memref<1x32xf32, #tpu.memory_space<vmem>>, vector<1x32xf32>
    %16 = vector.broadcast %15 : vector<1x32xf32> to vector<8x32xf32>
    %17 = arith.addf %14, %16 : vector<8x32xf32>
    %cst_16 = arith.constant 0.000000e+00 : f32
    %18 = vector.broadcast %cst_16 : f32 to vector<8x32xf32>
    %19 = arith.maximumf %17, %18 : vector<8x32xf32>
    %c0_17 = arith.constant 0 : index
    %c0_18 = arith.constant 0 : index
    %20 = vector.load %arg8[%c0_17, %c0_18] : memref<1x32xf32, #tpu.memory_space<vmem>>, vector<1x32xf32>
    %21 = vector.broadcast %20 : vector<1x32xf32> to vector<8x32xf32>
    %22 = arith.mulf %19, %21 : vector<8x32xf32>
    %cst_19 = arith.constant dense<0.000000e+00> : vector<8xf32>
    %23 = vector.multi_reduction <add>, %22, %cst_19 [1] : vector<8x32xf32> to vector<8xf32>
    %24 = vector.shape_cast %23 : vector<8xf32> to vector<8x1xf32>
    %c0_20 = arith.constant 0 : index
    %c0_21 = arith.constant 0 : index
    %25 = memref.load %arg9[%c0_20, %c0_21] : memref<1x1xf32, #tpu.memory_space<smem>>
    %26 = vector.broadcast %25 : f32 to vector<8x1xf32>
    %27 = arith.addf %24, %26 : vector<8x1xf32>
    %28 = math.tanh %27 : vector<8x1xf32>
    %c0_22 = arith.constant 0 : index
    %c0_23 = arith.constant 0 : index
    %29 = vector.load %arg10[%c0_22, %c0_23] : memref<8x1xf32, #tpu.memory_space<vmem>>, vector<8x1xf32>
    tpu.vector_store %arg10[%c0_22, %c0_23], %28 {strides = array<i32>} : memref<8x1xf32, #tpu.memory_space<vmem>>, vector<8x1xf32>,
    return
  }
  func.func @transform_0(%arg0: i32) -> (i32, i32) {
    %c0_i32 = arith.constant 0 : i32
    %c0_i32_0 = arith.constant 0 : i32
    return %arg0, %c0_i32 : i32, i32
  }
  func.func @transform_1(%arg0: i32) -> (i32, i32) {
    %c0_i32 = arith.constant 0 : i32
    %c0_i32_0 = arith.constant 0 : i32
    return %arg0, %c0_i32 : i32, i32
  }
  func.func @transform_2(%arg0: i32) -> (i32, i32) {
    %c0_i32 = arith.constant 0 : i32
    %c0_i32_0 = arith.constant 0 : i32
    %c0_i32_1 = arith.constant 0 : i32
    return %c0_i32, %c0_i32_0 : i32, i32
  }
  func.func @transform_3(%arg0: i32) -> (i32, i32) {
    %c0_i32 = arith.constant 0 : i32
    %c0_i32_0 = arith.constant 0 : i32
    %c0_i32_1 = arith.constant 0 : i32
    return %c0_i32, %c0_i32_0 : i32, i32
  }
  func.func @transform_4(%arg0: i32) -> (i32, i32) {
    %c0_i32 = arith.constant 0 : i32
    %c0_i32_0 = arith.constant 0 : i32
    %c0_i32_1 = arith.constant 0 : i32
    return %c0_i32, %c0_i32_0 : i32, i32
  }
  func.func @transform_5(%arg0: i32) -> (i32, i32) {
    %c0_i32 = arith.constant 0 : i32
    %c0_i32_0 = arith.constant 0 : i32
    %c0_i32_1 = arith.constant 0 : i32
    return %c0_i32, %c0_i32_0 : i32, i32
  }
  func.func @transform_6(%arg0: i32) -> (i32, i32) {
    %c0_i32 = arith.constant 0 : i32
    %c0_i32_0 = arith.constant 0 : i32
    %c0_i32_1 = arith.constant 0 : i32
    return %c0_i32, %c0_i32_0 : i32, i32
  }
  func.func @transform_7(%arg0: i32) -> (i32, i32) {
    %c0_i32 = arith.constant 0 : i32
    %c0_i32_0 = arith.constant 0 : i32
    %c0_i32_1 = arith.constant 0 : i32
    return %c0_i32, %c0_i32_0 : i32, i32
  }
  func.func @transform_8(%arg0: i32) -> (i32, i32) {
    %c0_i32 = arith.constant 0 : i32
    %c0_i32_0 = arith.constant 0 : i32
    %c0_i32_1 = arith.constant 0 : i32
    return %c0_i32, %c0_i32_0 : i32, i32
  }
  func.func @transform_9(%arg0: i32) -> (i32, i32) {
    %c0_i32 = arith.constant 0 : i32
    %c0_i32_0 = arith.constant 0 : i32
    return %arg0, %c0_i32 : i32, i32
  }
}

</mosaic_0001>

<llo_original>
// kernel: tpu_custom_call.1
$region0: #{tpu_custom_call.1}
  #allocation0 [shape = 'u32[]', space=smem, size = 0x4, offset = 0x4, fixed_abs, tag = 'smem constant byte address 0x4 - core index']
  #allocation1 [shape = 'u32[144,128]{1,0:T(1,128)}', space=vmem, size = 0x12000, scoped, tag = 'internal scratch']
  #allocation2 [shape = 'f32[1,1]{1,0:T(1,128)S(6)}', space=smem, size = 0x200, scoped, tag = 'scoped memory for tpu_custom_call.1']
  %s0 = inlined_call_operand.hbm [shape: bf16[8,24], index: 0, kind: input, shape index: {}]
  %s1 = inlined_call_operand.hbm [shape: bf16[8,8], index: 1, kind: input, shape index: {}]
  %s2 = inlined_call_operand.hbm [shape: bf16[24,32], index: 2, kind: input, shape index: {}]
  %s3 = inlined_call_operand.vmem [shape: bf16[8,32], index: 3, kind: input, shape index: {}]
  %s4 = inlined_call_operand.vmem [shape: f32[1,32], index: 4, kind: input, shape index: {}]
  %s5 = inlined_call_operand.hbm [shape: bf16[32,32], index: 5, kind: input, shape index: {}]
  %s6 = inlined_call_operand.vmem [shape: f32[1,32], index: 6, kind: input, shape index: {}]
  %s7 = inlined_call_operand.vmem [shape: f32[1,32], index: 7, kind: input, shape index: {}]
  %s8 = inlined_call_operand.<no memory space> [shape: f32[1,1], index: 8, kind: input, shape index: {}]
  %s9 = inlined_call_operand.vmem [shape: f32[8,1], index: 9, kind: output, shape index: {}]
  %s10 = sld [smem:[#allocation0]]
  $region62: #{tpu_custom_call.1} parent=0
    _
  %s12 = ssub.s32 1, %s10
  %s13 = scalar_select 0, %s12, %s10
  %14 = sst [smem:[#allocation2]] %s8
  $region1: #{tpu_custom_call.1} parent=0
    #allocation3 [shape = 'u8[2048]{0}', space=vmem, size = 0x800, scoped, tag = 'input window, operand 0, single buffered']
    #allocation4 [shape = 's32[1]{0}', space=sflag, size = 0x4, scoped, tag = 'scoped memory for tpu_custom_call.1']
    #allocation5 [shape = 'u8[2048]{0}', space=vmem, size = 0x800, scoped, tag = 'input window, operand 1, single buffered']
    #allocation6 [shape = 's32[1]{0}', space=sflag, size = 0x4, scoped, tag = 'scoped memory for tpu_custom_call.1']
    #allocation7 [shape = 'u8[6144]{0}', space=vmem, size = 0x1800, scoped, tag = 'input window, operand 2, single buffered']
    #allocation8 [shape = 'u8[8192]{0}', space=vmem, size = 0x2000, scoped, tag = 'input window, operand 5, single buffered']
    #allocation9 [shape = 's32[1]{0}', space=sflag, size = 0x4, scoped, tag = 'scoped memory for tpu_custom_call.1']
    %15 = vsyncpa [#allocation4], 0
    %16 = vsyncpa [#allocation6], 0
    %17 = vsyncpa [#allocation9], 0
    // Predicated region
    $region2: #{tpu_custom_call.1} parent=1 // pred_check
      _
    $region3: #{tpu_custom_call.1} parent=1 // pred_check_branch
      %19 = sbr.rel (0) target = $region5
    $region4: #{tpu_custom_call.1} parent=1 // pred_region
      %s21 = ssub.s32 64, 64
      %22 = vsyncadd [#allocation4], %s21
      %s24 = sshll.u32 [#allocation3], 4
      %s25 = int_to_ptr.vmem [resolvable:$true] %s24
      %27 = dma.hbm_to_vmem [thread:$0]  %s0, 64, %s25, [#allocation4]
    $region5: #{tpu_custom_call.1} parent=1 // pred_fallthru
      _
    // Predicated region
    $region6: #{tpu_custom_call.1} parent=1 // pred_check
      _
    $region7: #{tpu_custom_call.1} parent=1 // pred_check_branch
      %29 = sbr.rel (0) target = $region9
    $region8: #{tpu_custom_call.1} parent=1 // pred_region
      %s31 = ssub.s32 64, 64
      %32 = vsyncadd [#allocation6], %s31
      %s34 = sshll.u32 [#allocation5], 4
      %s35 = int_to_ptr.vmem [resolvable:$true] %s34
      %37 = dma.hbm_to_vmem [thread:$0]  %s1, 64, %s35, [#allocation6]
    $region9: #{tpu_custom_call.1} parent=1 // pred_fallthru
      _
    // Predicated region
    $region10: #{tpu_custom_call.1} parent=1 // pred_check
      _
    $region11: #{tpu_custom_call.1} parent=1 // pred_check_branch
      %39 = sbr.rel (0) target = $region13
    $region12: #{tpu_custom_call.1} parent=1 // pred_region
      %s41 = ssub.s32 192, 192
      %42 = vsyncadd [#allocation6], %s41
      %s43 = sshll.u32 [#allocation7], 4
      %s44 = int_to_ptr.vmem [resolvable:$true] %s43
      %49 = dma.hbm_to_vmem [thread:$0]  %s2, 192, %s44, [#allocation6], 64, 64, 4
    $region13: #{tpu_custom_call.1} parent=1 // pred_fallthru
      _
    // Predicated region
    $region14: #{tpu_custom_call.1} parent=1 // pred_check
      _
    $region15: #{tpu_custom_call.1} parent=1 // pred_check_branch
      %51 = sbr.rel (0) target = $region17
    $region16: #{tpu_custom_call.1} parent=1 // pred_region
      _
    $region17: #{tpu_custom_call.1} parent=1 // pred_fallthru
      _
    // Predicated region
    $region18: #{tpu_custom_call.1} parent=1 // pred_check
      _
    $region19: #{tpu_custom_call.1} parent=1 // pred_check_branch
      %53 = sbr.rel (0) target = $region21
    $region20: #{tpu_custom_call.1} parent=1 // pred_region
      _
    $region21: #{tpu_custom_call.1} parent=1 // pred_fallthru
      _
    // Predicated region
    $region22: #{tpu_custom_call.1} parent=1 // pred_check
      _
    $region23: #{tpu_custom_call.1} parent=1 // pred_check_branch
      %55 = sbr.rel (0) target = $region25
    $region24: #{tpu_custom_call.1} parent=1 // pred_region
      %s57 = ssub.s32 256, 256
      %58 = vsyncadd [#allocation9], %s57
      %s59 = sshll.u32 [#allocation8], 4
      %s60 = int_to_ptr.vmem [resolvable:$true] %s59
      %65 = dma.hbm_to_vmem [thread:$0]  %s5, 256, %s60, [#allocation9], 64, 64, 4
    $region25: #{tpu_custom_call.1} parent=1 // pred_fallthru
      _
    // Predicated region
    $region26: #{tpu_custom_call.1} parent=1 // pred_check
      _
    $region27: #{tpu_custom_call.1} parent=1 // pred_check_branch
      %67 = sbr.rel (0) target = $region29
    $region28: #{tpu_custom_call.1} parent=1 // pred_region
      _
    $region29: #{tpu_custom_call.1} parent=1 // pred_fallthru
      _
    // Predicated region
    $region30: #{tpu_custom_call.1} parent=1 // pred_check
      _
    $region31: #{tpu_custom_call.1} parent=1 // pred_check_branch
      %69 = sbr.rel (0) target = $region33
    $region32: #{tpu_custom_call.1} parent=1 // pred_region
      _
    $region33: #{tpu_custom_call.1} parent=1 // pred_fallthru
      _
    // Predicated region
    $region34: #{tpu_custom_call.1} parent=1 // pred_check
      _
    $region35: #{tpu_custom_call.1} parent=1 // pred_check_branch
      %71 = sbr.rel (0) target = $region37
    $region36: #{tpu_custom_call.1} parent=1 // pred_region
      _
    $region37: #{tpu_custom_call.1} parent=1 // pred_fallthru
      _
    // Predicated region
    $region38: #{tpu_custom_call.1} parent=1 // pred_check
      _
    $region39: #{tpu_custom_call.1} parent=1 // pred_check_branch
      %73 = sbr.rel (0) target = $region41
    $region40: #{tpu_custom_call.1} parent=1 // pred_region
      %74 = dma.done [#allocation4], 64
    $region41: #{tpu_custom_call.1} parent=1 // pred_fallthru
      _
    // Predicated region
    $region42: #{tpu_custom_call.1} parent=1 // pred_check
      _
    $region43: #{tpu_custom_call.1} parent=1 // pred_check_branch
      %76 = sbr.rel (0) target = $region45
    $region44: #{tpu_custom_call.1} parent=1 // pred_region
      %77 = dma.done [#allocation6], 64
    $region45: #{tpu_custom_call.1} parent=1 // pred_fallthru
      _
    // Predicated region
    $region46: #{tpu_custom_call.1} parent=1 // pred_check
      _
    $region47: #{tpu_custom_call.1} parent=1 // pred_check_branch
      %79 = sbr.rel (0) target = $region49
    $region48: #{tpu_custom_call.1} parent=1 // pred_region
      %80 = dma.done [#allocation6], 192
    $region49: #{tpu_custom_call.1} parent=1 // pred_fallthru
      _
    // Predicated region
    $region50: #{tpu_custom_call.1} parent=1 // pred_check
      _
    $region51: #{tpu_custom_call.1} parent=1 // pred_check_branch
      %82 = sbr.rel (0) target = $region53
    $region52: #{tpu_custom_call.1} parent=1 // pred_region
      %83 = dma.done [#allocation9], 256
    $region53: #{tpu_custom_call.1} parent=1 // pred_fallthru
      _
    %v85 = vld [vmem:[#allocation3] sm:$0xf]
    %v86 = vld [vmem:[#allocation7] sm:$0xf]
    %v87 = vld [vmem:[#allocation7 + $0x4] sm:$0xf]
    %v88 = vld [vmem:[#allocation7 + $0x8] sm:$0xf]
    %v89 = vld [vmem:[#allocation5] sm:$0xf]
    %v90 = vld [vmem:[%s3] sm:$0xf]
    %vm91 = vcmask 64512
    %v93 = vsel %vm91, %v89, 0
    %vm95 = vcmask 1043456
    %v97 = vsel %vm95, %v90, 0
    %99 = vmatprep.subr.bf16.mxu0 0
    %100 = vmatpush1.bf16.msra.mxu0 0
    %101 = vmatprep.subr.bf16.mxu0 0
    %102 = vmatpush1.bf16.msra.mxu0 0
    %103 = vmatprep.subr.bf16.mxu0 0
    %104 = vmatpush1.bf16.msra.mxu0 0
    %105 = vmatprep.subr.bf16.mxu0 0
    %106 = vmatpush1.bf16.msra.mxu0 0
    %107 = vmatprep.subr.bf16.mxu0 0
    %108 = vmatpush1.bf16.msra.mxu0 0
    %109 = vmatprep.subr.bf16.mxu0 0
    %110 = vmatpush1.bf16.msra.mxu0 0
    %111 = vmatprep.subr.bf16.mxu0 0
    %112 = vmatpush1.bf16.msra.mxu0 0
    %113 = vmatprep.subr.bf16.mxu0 0
    %114 = vmatpush1.bf16.msra.mxu0 %v97
    %115 = vmatprep.subr.bf16.mxu0 0
    %116 = vmatpush2.bf16.msra.mxu0 0
    %117 = vmatprep.subr.bf16.mxu0 0
    %118 = vmatpush2.bf16.msra.mxu0 0
    %119 = vmatprep.subr.bf16.mxu0 0
    %120 = vmatpush2.bf16.msra.mxu0 0
    %121 = vmatprep.subr.bf16.mxu0 0
    %122 = vmatpush2.bf16.msra.mxu0 0
    %123 = vmatprep.subr.bf16.mxu0 0
    %124 = vmatpush2.bf16.msra.mxu0 0
    %125 = vmatprep.subr.bf16.mxu0 0
    %126 = vmatpush2.bf16.msra.mxu0 0
    %127 = vmatprep.subr.bf16.mxu0 0
    %128 = vmatpush2.bf16.msra.mxu0 0
    %129 = vmatprep.subr.bf16.mxu0 0
    %130 = vmatpush2.bf16.msra.mxu0 0
    %131 = vmatprep.mubr.bf16.mxu0 0
    %132 = vmatmul.mubr.bf16.gmra.mxu0 %v93
    %v133 = vpop.f32.mrf.mxu0
    %v134 = vadd.f32 0.0, %v133
    %v135 = vpop.f32.mrf.mxu0
    %v136 = vpop.f32.mrf.mxu0
    %v137 = vpop.f32.mrf.mxu0
    %138 = vdwg.mxu0
    %v142 = vunpack.c.l.b16 %v86
    %v143 = vunpack.c.l.b16 %v87
    %v144 = vunpack.c.l.b16 %v88
    %v145 = vpack.c.b16 %v143, %v142
    %v146 = vpack.c.b16 %v144, %v144
    %vm148 = vcmask 195584
    %v150 = vsel %vm148, %v85, 0
    %v153 = vsel %vm95, %v146, 0
    %155 = vmatprep.subr.bf16.mxu0 0
    %156 = vmatpush1.bf16.msra.mxu0 0
    %157 = vmatprep.subr.bf16.mxu0 0
    %158 = vmatpush1.bf16.msra.mxu0 0
    %159 = vmatprep.subr.bf16.mxu0 0
    %160 = vmatpush1.bf16.msra.mxu0 0
    %161 = vmatprep.subr.bf16.mxu0 0
    %162 = vmatpush1.bf16.msra.mxu0 0
    %163 = vmatprep.subr.bf16.mxu0 0
    %164 = vmatpush1.bf16.msra.mxu0 0
    %165 = vmatprep.subr.bf16.mxu0 0
    %166 = vmatpush1.bf16.msra.mxu0 0
    %167 = vmatprep.subr.bf16.mxu0 0
    %168 = vmatpush1.bf16.msra.mxu0 %v153
    %169 = vmatprep.subr.bf16.mxu0 0
    %170 = vmatpush1.bf16.msra.mxu0 %v145
    %171 = vmatprep.subr.bf16.mxu0 0
    %172 = vmatpush2.bf16.msra.mxu0 0
    %173 = vmatprep.subr.bf16.mxu0 0
    %174 = vmatpush2.bf16.msra.mxu0 0
    %175 = vmatprep.subr.bf16.mxu0 0
    %176 = vmatpush2.bf16.msra.mxu0 0
    %177 = vmatprep.subr.bf16.mxu0 0
    %178 = vmatpush2.bf16.msra.mxu0 0
    %179 = vmatprep.subr.bf16.mxu0 0
    %180 = vmatpush2.bf16.msra.mxu0 0
    %181 = vmatprep.subr.bf16.mxu0 0
    %182 = vmatpush2.bf16.msra.mxu0 0
    %183 = vmatprep.subr.bf16.mxu0 0
    %184 = vmatpush2.bf16.msra.mxu0 0
    %185 = vmatprep.subr.bf16.mxu0 0
    %186 = vmatpush2.bf16.msra.mxu0 0
    %187 = vmatprep.mubr.bf16.mxu0 0
    %188 = vmatmul.mubr.bf16.gmra.mxu0 %v150
    %v189 = vpop.f32.mrf.mxu0
    %v190 = vadd.f32 %v134, %v189
    %v191 = vpop.f32.mrf.mxu0
    %v192 = vpop.f32.mrf.mxu0
    %v193 = vpop.f32.mrf.mxu0
    %194 = vdwg.mxu0
    %v195 = vld [vmem:[%s4] sm:$0x1]
    %v197 = vlaneseq
    %v198 = vshrl.u32 %v197, 7
    %v199 = vsub.s32 0, %v198
    %v200 = vrot.slane %v195, %v199
    %v202 = vadd.f32 %v190, %v200
    %v203 = vmax.f32 %v202, 0.0
    %v204 = vpack.c.bf16 %v203, %v203
    %v205 = vld [vmem:[#allocation8] sm:$0xf]
    %v206 = vld [vmem:[#allocation8 + $0x4] sm:$0xf]
    %v207 = vld [vmem:[#allocation8 + $0x8] sm:$0xf]
    %v208 = vld [vmem:[#allocation8 + $0xc] sm:$0xf]
    %v209 = vld [vmem:[%s6] sm:$0x1]
    %v211 = vlaneseq
    %v212 = vshrl.u32 %v211, 7
    %v213 = vsub.s32 0, %v212
    %v214 = vrot.slane %v209, %v213
    %v220 = vunpack.c.l.b16 %v205
    %v221 = vunpack.c.l.b16 %v206
    %v222 = vunpack.c.l.b16 %v207
    %v223 = vunpack.c.l.b16 %v208
    %v224 = vpack.c.b16 %v221, %v220
    %v225 = vpack.c.b16 %v223, %v222
    %vm228 = vcmask 261120
    %v230 = vsel %vm228, %v204, 0
    %232 = vmatprep.subr.bf16.mxu0 0
    %233 = vmatpush1.bf16.msra.mxu0 0
    %234 = vmatprep.subr.bf16.mxu0 0
    %235 = vmatpush1.bf16.msra.mxu0 0
    %236 = vmatprep.subr.bf16.mxu0 0
    %237 = vmatpush1.bf16.msra.mxu0 0
    %238 = vmatprep.subr.bf16.mxu0 0
    %239 = vmatpush1.bf16.msra.mxu0 0
    %240 = vmatprep.subr.bf16.mxu0 0
    %241 = vmatpush1.bf16.msra.mxu0 0
    %242 = vmatprep.subr.bf16.mxu0 0
    %243 = vmatpush1.bf16.msra.mxu0 0
    %244 = vmatprep.subr.bf16.mxu0 0
    %245 = vmatpush1.bf16.msra.mxu0 %v225
    %246 = vmatprep.subr.bf16.mxu0 0
    %247 = vmatpush1.bf16.msra.mxu0 %v224
    %248 = vmatprep.subr.bf16.mxu0 0
    %249 = vmatpush2.bf16.msra.mxu0 0
    %250 = vmatprep.subr.bf16.mxu0 0
    %251 = vmatpush2.bf16.msra.mxu0 0
    %252 = vmatprep.subr.bf16.mxu0 0
    %253 = vmatpush2.bf16.msra.mxu0 0
    %254 = vmatprep.subr.bf16.mxu0 0
    %255 = vmatpush2.bf16.msra.mxu0 0
    %256 = vmatprep.subr.bf16.mxu0 0
    %257 = vmatpush2.bf16.msra.mxu0 0
    %258 = vmatprep.subr.bf16.mxu0 0
    %259 = vmatpush2.bf16.msra.mxu0 0
    %260 = vmatprep.subr.bf16.mxu0 0
    %261 = vmatpush2.bf16.msra.mxu0 0
    %262 = vmatprep.subr.bf16.mxu0 0
    %263 = vmatpush2.bf16.msra.mxu0 0
    %264 = vmatprep.mubr.bf16.mxu0 0
    %265 = vmatmul.mubr.bf16.gmra.mxu0 %v230
    %v266 = vpop.f32.mrf.mxu0
    %v267 = vadd.f32 %v214, %v266
    %v268 = vpop.f32.mrf.mxu0
    %v269 = vpop.f32.mrf.mxu0
    %v270 = vpop.f32.mrf.mxu0
    %271 = vdwg.mxu0
    %v272 = vmax.f32 %v267, 0.0
    %v273 = vld [vmem:[%s7] sm:$0x1]
    %v275 = vlaneseq
    %v276 = vshrl.u32 %v275, 7
    %v277 = vsub.s32 0, %v276
    %v278 = vrot.slane %v273, %v277
    %v280 = vmul.f32 %v272, %v278
    %v281 = vsel %vm228, %v280, 0.0
    %282 = vadd.xlane.f32.xlu0 %v281
    %v283 = vpop.xlane.xlu0 %282
    %s284 = sld [smem:[#allocation2]]
    %v285 = vstv %s284
    %v286 = vadd.f32 %v283, %v285
    %v287 = vtanh.pop %v286
    %vm288 = vcmask 7168
    %289 = vst.msk [vmem:[%s9] sm:$0xff] %vm288, %v287
    // Predicated region
    $region54: #{tpu_custom_call.1} parent=1 // pred_check
      _
    $region55: #{tpu_custom_call.1} parent=1 // pred_check_branch
      %291 = sbr.rel (0) target = $region57
    $region56: #{tpu_custom_call.1} parent=1 // pred_region
      _
    $region57: #{tpu_custom_call.1} parent=1 // pred_fallthru
      _
    // Predicated region
    $region58: #{tpu_custom_call.1} parent=1 // pred_check
      _
    $region59: #{tpu_custom_call.1} parent=1 // pred_check_branch
      %293 = sbr.rel (0) target = $region61
    $region60: #{tpu_custom_call.1} parent=1 // pred_region
      _
    $region61: #{tpu_custom_call.1} parent=1 // pred_fallthru
      _
    %294 = vsyncpa [#allocation4], 1
    %295 = vsyncpa [#allocation6], 1
    %296 = vsyncpa [#allocation9], 1

</llo_original>
